<compile_context>
chip_gen: v6e
topology: v6e:2x2x1
jax: 0.10.0
libtpu: 0.0.40
codegen_flags: <defaults>
</compile_context>

<pallas_src>
import functools

import jax
import jax.numpy as jnp
from jax.experimental import pallas as pl
from jax.experimental.pallas import tpu as pltpu

EPS = 1e-5  # InstanceNorm3d default eps


def _round_up(x, m):
    return ((x + m - 1) // m) * m


def _fused_kernel(x_ref, w_ref, m_ref, a_ref, o_ref, panel_ref, s1_ref, s2_ref, *,
                  cin, k_sizes, hp, wp, l_tile, n_l, dhw):
    # x_ref:     (1, 1, Cin, WIN) bf16      input window (tile + conv halo) for (sample, tile)
    # w_ref:     (Cout, k^3*Cin) bf16       conv weights as one matmul matrix (resident)
    # m_ref:     (1, L_TILE) f32            1.0 on valid output voxels of this tile
    # a_ref:     (1,) f32 in SMEM           PReLU alpha
    # o_ref:     (1, NL, Cout, L_TILE) f32  whole-sample tile-major output, resident across l
    # panel_ref: (k^3*Cin, L_TILE) bf16     scratch patch panel
    # s1/s2_ref: (Cout, 1) f32              running masked sum / sum-of-squares
    kD, kH, kW = k_sizes
    l = pl.program_id(1)

    @pl.when(l == 0)
    def _():
        s1_ref[...] = jnp.zeros_like(s1_ref)
        s2_ref[...] = jnp.zeros_like(s2_ref)

    # --- build the patch panel once: row o*Cin + c = x[c, q_local + off_o] (static slices) ---
    xw = x_ref[0, 0]                                    # (Cin, WIN) bf16, stays in VMEM
    o_idx = 0
    for dz in range(kD):
        for dy in range(kH):
            for dx in range(kW):
                off = dz * hp * wp + dy * wp + dx
                panel_ref[o_idx * cin:(o_idx + 1) * cin, :] = xw[:, off:off + l_tile]
                o_idx += 1

    # --- conv as ONE MXU matmul: (Cout, K=k^3*Cin) x (K, L_TILE), bf16 in / f32 accumulate ---
    conv = jnp.dot(w_ref[...], panel_ref[...], preferred_element_type=jnp.float32)
    # NOTE: conv bias intentionally omitted -- InstanceNorm(affine=False) cancels it exactly.

    # --- single-pass masked statistics for InstanceNorm (valid voxels only) ---
    mt = m_ref[...]                                     # (1, L_TILE)
    xm = conv * mt
    s1_ref[...] += jnp.sum(xm, axis=-1, keepdims=True)
    s2_ref[...] += jnp.sum(conv * xm, axis=-1, keepdims=True)

    # stash the raw conv tile (lane-dense full-slab store, Cout on sublanes)
    o_ref[0, l] = conv

    # --- finalize on the last tile: normalize + PReLU over the whole resident sample ---
    @pl.when(l == n_l - 1)
    def _():
        inv_n = jnp.float32(1.0 / dhw)
        mean = s1_ref[...] * inv_n                      # (Cout, 1)
        var = s2_ref[...] * inv_n - mean * mean
        scale = jax.lax.rsqrt(var + EPS)
        y = (o_ref[0] - mean[None]) * scale[None]       # (NL, Cout, L_TILE)
        alpha = a_ref[0]
        o_ref[0] = jnp.where(y >= 0, y, alpha * y)


def conv3d_in_prelu(x, weight, bias, prelu_a, padding, *, l_tile=4096):
    """x: (N, Cin, D, H, W); weight: (Cout, Cin, kD, kH, kW); bias: (Cout,); prelu_a: scalar.

    `bias` is accepted for API parity but not applied: a per-channel constant bias is exactly
    cancelled by InstanceNorm3d(affine=False) mean subtraction (validated against the reference).
    """
    del bias
    N, Cin, D, H, W = x.shape
    Cout, _, kD, kH, kW = weight.shape
    p = padding
    Dp, Hp, Wp = D + 2 * p, H + 2 * p, W + 2 * p
    P_grid = Dp * Hp * Wp
    DHW = D * H * W
    K3 = kD * kH * kW
    Kk = K3 * Cin

    # Flattened padded-grid layout: q = z*Hp*Wp + y*Wp + x (valid iff z<D, y<H, x<W);
    # conv input for offset (dz,dy,dx) sits at q + dz*Hp*Wp + dy*Wp + dx.
    l_need = (D - 1) * Hp * Wp + (H - 1) * Wp + (W - 1) + 1
    off_max = (kD - 1) * Hp * Wp + (kH - 1) * Wp + (kW - 1)
    L_TILE = min(_round_up(l_need, 128), _round_up(l_tile, 128))
    L_pad = _round_up(l_need, L_TILE)
    NL = L_pad // L_TILE
    WIN = _round_up(L_TILE + off_max, 128)              # per-tile input window (tile + halo)
    P_pad = _round_up(max(P_grid, (NL - 1) * L_TILE + WIN), 128)

    # ----- cheap host prep (~input bytes; no im2col) -----
    xp = jnp.pad(x, ((0, 0), (0, 0), (p, p), (p, p), (p, p)))
    x_flat = xp.reshape(N, Cin, P_grid)
    x_flat = jnp.pad(x_flat, ((0, 0), (0, 0), (0, P_pad - P_grid))).astype(jnp.bfloat16)
    # Overlapping per-tile windows as a leading dim: the kernel then only needs static slices
    # (no dynamic lane-dim indexing).  Input is the cheap stream (Cin bf16 vs Cout f32 output).
    x_tiles = jnp.stack(
        [x_flat[:, :, i * L_TILE:i * L_TILE + WIN] for i in range(NL)], axis=1)

    # Single (Cout, k^3*Cin) weight matrix, ordering (dz,dy,dx,cin) matching the panel rows.
    w_mat = jnp.transpose(weight, (0, 2, 3, 4, 1)).reshape(Cout, Kk).astype(jnp.bfloat16)
    a_vec = jnp.asarray(prelu_a, jnp.float32).reshape(1)

    # Valid-voxel mask over the flattened padded grid (tiny; tiled (1, L_TILE) per step).
    q = jnp.arange(L_pad)
    valid = ((q // (Hp * Wp)) < D) & (((q // Wp) % Hp) < H) & ((q % Wp) < W)
    mask = valid.astype(jnp.float32).reshape(1, L_pad)

    kernel = functools.partial(
        _fused_kernel, cin=Cin, k_sizes=(kD, kH, kW), hp=Hp, wp=Wp,
        l_tile=L_TILE, n_l=NL, dhw=DHW)

    flops = 2 * N * DHW * Kk * Cout
    bytes_accessed = (x_tiles.size * 2 + Cout * Kk * 2 + L_pad * 4
                      + N * NL * Cout * L_TILE * 4)
    # VMEM budget: 2x input window + resident per-sample output + panel + weights (+ slack);
    # capped at 56 MiB so the same code stays inside v7x's 64 MiB per-TC VMEM.
    vmem_need = (2 * Cin * WIN * 2 + Cout * Kk * 2 + 2 * L_TILE * 4
                 + 2 * NL * Cout * L_TILE * 4 + Kk * L_TILE * 2 + (1 << 20))
    vmem_limit = int(min(max(vmem_need, 32 * 1024 * 1024), 56 * 1024 * 1024))

    out = pl.pallas_call(
        kernel,
        out_shape=jax.ShapeDtypeStruct((N, NL, Cout, L_TILE), jnp.float32),
        grid=(N, NL),
        in_specs=[
            pl.BlockSpec((1, 1, Cin, WIN), lambda n, l: (n, l, 0, 0)),   # per-(sample,tile) window
            pl.BlockSpec((Cout, Kk), lambda n, l: (0, 0)),               # resident weight matrix
            pl.BlockSpec((1, L_TILE), lambda n, l: (0, l)),              # per-tile valid mask
            pl.BlockSpec(memory_space=pltpu.MemorySpace.SMEM),           # PReLU alpha scalar
        ],
        out_specs=pl.BlockSpec((1, NL, Cout, L_TILE), lambda n, l: (n, 0, 0, 0)),
        scratch_shapes=[
            pltpu.VMEM((Kk, L_TILE), jnp.bfloat16),   # patch panel
            pltpu.VMEM((Cout, 1), jnp.float32),       # running sum
            pltpu.VMEM((Cout, 1), jnp.float32),       # running sum of squares
        ],
        compiler_params=pltpu.CompilerParams(
            dimension_semantics=("parallel", "arbitrary"),
            vmem_limit_bytes=vmem_limit),
        cost_estimate=pl.CostEstimate(
            flops=flops, transcendentals=N * Cout, bytes_accessed=bytes_accessed),
    )(x_tiles, w_mat, mask, a_vec)

    # tile-major -> flat q -> NCDHW crop; the transpose/reshape/slice chain fuses into the one
    # XLA copy the crop needs anyway.
    out = jnp.transpose(out, (0, 2, 1, 3)).reshape(N, Cout, L_pad)
    if L_pad >= P_grid:
        out = out[:, :, :P_grid]
    else:
        out = jnp.pad(out, ((0, 0), (0, 0), (0, P_grid - L_pad)))
    return out.reshape(N, Cout, Dp, Hp, Wp)[:, :, :D, :H, :W]


def ref_forward(x, weight, bias, prelu_a, padding):
    """Pure-JAX reference matching the PyTorch module semantics (bias included)."""
    o = jax.lax.conv_general_dilated(
        x, weight, window_strides=(1, 1, 1),
        padding=[(padding, padding)] * 3,
        dimension_numbers=("NCDHW", "OIDHW", "NCDHW"))
    o = o + bias.reshape(1, -1, 1, 1, 1)
    mean = o.mean(axis=(2, 3, 4), keepdims=True)
    var = ((o - mean) ** 2).mean(axis=(2, 3, 4), keepdims=True)
    o = (o - mean) / jnp.sqrt(var + EPS)
    return jnp.where(o >= 0, o, prelu_a * o)


if __name__ == "__main__":
    # small shapes consistent with conv(in_channels=4, out_channels=8, kSize=3, padding=1)
    N, Cin, Cout, D, H, W, k, pad = 2, 4, 8, 8, 8, 8, 3, 1
    key = jax.random.PRNGKey(0)
    kx, kw, kb = jax.random.split(key, 3)
    x = jax.random.normal(kx, (N, Cin, D, H, W), jnp.float32)
    # deterministic Conv3d-style init (uniform in +/- 1/sqrt(fan_in))
    fan_in = Cin * k * k * k
    bound = 1.0 / (fan_in ** 0.5)
    weight = jax.random.uniform(kw, (Cout, Cin, k, k, k), jnp.float32, -bound, bound)
    bias = jax.random.uniform(kb, (Cout,), jnp.float32, -bound, bound)
    prelu_a = jnp.float32(0.25)  # PReLU default init

    # l_tile=256 -> 4 spatial tiles at this size: exercises the tiled accumulate/finalize path.
    out = conv3d_in_prelu(x, weight, bias, prelu_a, pad, l_tile=256)
    jax.block_until_ready(out)

    ref = ref_forward(x, weight, bias, prelu_a, pad)
    assert out.shape == (N, Cout, D, H, W)
    assert jnp.allclose(out, ref, atol=2e-2, rtol=2e-2), float(jnp.max(jnp.abs(out - ref)))
    print("KERNEL_OK")
</pallas_src>

<mosaic_0001>
module attributes {stable_mosaic.version = 11 : i64} {
  func.func @_fused_kernel(%arg0: i32, %arg1: i32, %arg2: memref<1x1x4x512xbf16, #tpu.memory_space<vmem>>, %arg3: memref<8x108xbf16, #tpu.memory_space<vmem>>, %arg4: memref<1x256xf32, #tpu.memory_space<vmem>>, %arg5: memref<1xf32, #tpu.memory_space<smem>>, %arg6: memref<1x4x8x256xf32, #tpu.memory_space<vmem>>, %arg7: memref<108x256xbf16, #tpu.memory_space<vmem>>, %arg8: memref<8x1xf32, #tpu.memory_space<vmem>>, %arg9: memref<8x1xf32, #tpu.memory_space<vmem>>) attributes {dimension_semantics = [#tpu.dimension_semantics<parallel>, #tpu.dimension_semantics<arbitrary>], iteration_bounds = array<i64: 2, 4>, scalar_prefetch = 0 : i64, scratch_operands = 3 : i64, tpu.core_type = #tpu.core_type<tc>, window_params = [{transform_indices = @transform_0, window_bounds = array<i64: 1, 1, 4, 512>}, {pipeline_mode = #tpu.pipeline_mode<synchronous>, transform_indices = @transform_1, window_bounds = array<i64: 8, 108>}, {transform_indices = @transform_2, window_bounds = array<i64: 1, 256>}, {transform_indices = @transform_3, window_bounds = array<i64: 1>}, {transform_indices = @transform_4, window_bounds = array<i64: 1, 4, 8, 256>}]} {
    %c0_i32 = arith.constant 0 : i32
    %0 = arith.cmpi eq, %arg1, %c0_i32 : i32
    %1 = arith.extui %0 : i1 to i32
    %c0_i32_0 = arith.constant 0 : i32
    %2 = arith.cmpi ne, %1, %c0_i32_0 : i32
    scf.if %2 {
      %cst_52 = arith.constant 0.000000e+00 : f32
      %83 = vector.broadcast %cst_52 : f32 to vector<8x1xf32>
      %c0_53 = arith.constant 0 : index
      %c0_54 = arith.constant 0 : index
      %84 = vector.load %arg8[%c0_53, %c0_54] : memref<8x1xf32, #tpu.memory_space<vmem>>, vector<8x1xf32>
      tpu.vector_store %arg8[%c0_53, %c0_54], %83 {strides = array<i32>} : memref<8x1xf32, #tpu.memory_space<vmem>>, vector<8x1xf32>,
      %cst_55 = arith.constant 0.000000e+00 : f32
      %85 = vector.broadcast %cst_55 : f32 to vector<8x1xf32>
      %c0_56 = arith.constant 0 : index
      %c0_57 = arith.constant 0 : index
      %86 = vector.load %arg9[%c0_56, %c0_57] : memref<8x1xf32, #tpu.memory_space<vmem>>, vector<8x1xf32>
      tpu.vector_store %arg9[%c0_56, %c0_57], %85 {strides = array<i32>} : memref<8x1xf32, #tpu.memory_space<vmem>>, vector<8x1xf32>,
    } else {
    }
    %c0 = arith.constant 0 : index
    %c0_1 = arith.constant 0 : index
    %c0_2 = arith.constant 0 : index
    %c0_3 = arith.constant 0 : index
    %3 = vector.load %arg2[%c0, %c0_1, %c0_2, %c0_3] : memref<1x1x4x512xbf16, #tpu.memory_space<vmem>>, vector<1x1x4x512xbf16>
    %4 = vector.shape_cast %3 : vector<1x1x4x512xbf16> to vector<4x512xbf16>
    %5 = vector.extract_strided_slice %4 {offsets = [0, 0], sizes = [4, 256], strides = [1, 1]} : vector<4x512xbf16> to vector<4x256xbf16>
    %c0_4 = arith.constant 0 : index
    %c0_5 = arith.constant 0 : index
    %6 = vector.load %arg7[%c0_4, %c0_5] : memref<108x256xbf16, #tpu.memory_space<vmem>>, vector<4x256xbf16>
    tpu.vector_store %arg7[%c0_4, %c0_5], %5 {strides = array<i32>} : memref<108x256xbf16, #tpu.memory_space<vmem>>, vector<4x256xbf16>,
    %7 = vector.extract_strided_slice %4 {offsets = [0, 1], sizes = [4, 256], strides = [1, 1]} : vector<4x512xbf16> to vector<4x256xbf16>
    %c4 = arith.constant 4 : index
    %c0_6 = arith.constant 0 : index
    %8 = vector.load %arg7[%c4, %c0_6] : memref<108x256xbf16, #tpu.memory_space<vmem>>, vector<4x256xbf16>
    tpu.vector_store %arg7[%c4, %c0_6], %7 {strides = array<i32>} : memref<108x256xbf16, #tpu.memory_space<vmem>>, vector<4x256xbf16>,
    %9 = vector.extract_strided_slice %4 {offsets = [0, 2], sizes = [4, 256], strides = [1, 1]} : vector<4x512xbf16> to vector<4x256xbf16>
    %c8 = arith.constant 8 : index
    %c0_7 = arith.constant 0 : index
    %10 = vector.load %arg7[%c8, %c0_7] : memref<108x256xbf16, #tpu.memory_space<vmem>>, vector<4x256xbf16>
    tpu.vector_store %arg7[%c8, %c0_7], %9 {strides = array<i32>} : memref<108x256xbf16, #tpu.memory_space<vmem>>, vector<4x256xbf16>,
    %11 = vector.extract_strided_slice %4 {offsets = [0, 10], sizes = [4, 256], strides = [1, 1]} : vector<4x512xbf16> to vector<4x256xbf16>
    %c12 = arith.constant 12 : index
    %c0_8 = arith.constant 0 : index
    %12 = vector.load %arg7[%c12, %c0_8] : memref<108x256xbf16, #tpu.memory_space<vmem>>, vector<4x256xbf16>
    tpu.vector_store %arg7[%c12, %c0_8], %11 {strides = array<i32>} : memref<108x256xbf16, #tpu.memory_space<vmem>>, vector<4x256xbf16>,
    %13 = vector.extract_strided_slice %4 {offsets = [0, 11], sizes = [4, 256], strides = [1, 1]} : vector<4x512xbf16> to vector<4x256xbf16>
    %c16 = arith.constant 16 : index
    %c0_9 = arith.constant 0 : index
    %14 = vector.load %arg7[%c16, %c0_9] : memref<108x256xbf16, #tpu.memory_space<vmem>>, vector<4x256xbf16>
    tpu.vector_store %arg7[%c16, %c0_9], %13 {strides = array<i32>} : memref<108x256xbf16, #tpu.memory_space<vmem>>, vector<4x256xbf16>,
    %15 = vector.extract_strided_slice %4 {offsets = [0, 12], sizes = [4, 256], strides = [1, 1]} : vector<4x512xbf16> to vector<4x256xbf16>
    %c20 = arith.constant 20 : index
    %c0_10 = arith.constant 0 : index
    %16 = vector.load %arg7[%c20, %c0_10] : memref<108x256xbf16, #tpu.memory_space<vmem>>, vector<4x256xbf16>
    tpu.vector_store %arg7[%c20, %c0_10], %15 {strides = array<i32>} : memref<108x256xbf16, #tpu.memory_space<vmem>>, vector<4x256xbf16>,
    %17 = vector.extract_strided_slice %4 {offsets = [0, 20], sizes = [4, 256], strides = [1, 1]} : vector<4x512xbf16> to vector<4x256xbf16>
    %c24 = arith.constant 24 : index
    %c0_11 = arith.constant 0 : index
    %18 = vector.load %arg7[%c24, %c0_11] : memref<108x256xbf16, #tpu.memory_space<vmem>>, vector<4x256xbf16>
    tpu.vector_store %arg7[%c24, %c0_11], %17 {strides = array<i32>} : memref<108x256xbf16, #tpu.memory_space<vmem>>, vector<4x256xbf16>,
    %19 = vector.extract_strided_slice %4 {offsets = [0, 21], sizes = [4, 256], strides = [1, 1]} : vector<4x512xbf16> to vector<4x256xbf16>
    %c28 = arith.constant 28 : index
    %c0_12 = arith.constant 0 : index
    %20 = vector.load %arg7[%c28, %c0_12] : memref<108x256xbf16, #tpu.memory_space<vmem>>, vector<4x256xbf16>
    tpu.vector_store %arg7[%c28, %c0_12], %19 {strides = array<i32>} : memref<108x256xbf16, #tpu.memory_space<vmem>>, vector<4x256xbf16>,
    %21 = vector.extract_strided_slice %4 {offsets = [0, 22], sizes = [4, 256], strides = [1, 1]} : vector<4x512xbf16> to vector<4x256xbf16>
    %c32 = arith.constant 32 : index
    %c0_13 = arith.constant 0 : index
    %22 = vector.load %arg7[%c32, %c0_13] : memref<108x256xbf16, #tpu.memory_space<vmem>>, vector<4x256xbf16>
    tpu.vector_store %arg7[%c32, %c0_13], %21 {strides = array<i32>} : memref<108x256xbf16, #tpu.memory_space<vmem>>, vector<4x256xbf16>,
    %23 = vector.extract_strided_slice %4 {offsets = [0, 100], sizes = [4, 256], strides = [1, 1]} : vector<4x512xbf16> to vector<4x256xbf16>
    %c36 = arith.constant 36 : index
    %c0_14 = arith.constant 0 : index
    %24 = vector.load %arg7[%c36, %c0_14] : memref<108x256xbf16, #tpu.memory_space<vmem>>, vector<4x256xbf16>
    tpu.vector_store %arg7[%c36, %c0_14], %23 {strides = array<i32>} : memref<108x256xbf16, #tpu.memory_space<vmem>>, vector<4x256xbf16>,
    %25 = vector.extract_strided_slice %4 {offsets = [0, 101], sizes = [4, 256], strides = [1, 1]} : vector<4x512xbf16> to vector<4x256xbf16>
    %c40 = arith.constant 40 : index
    %c0_15 = arith.constant 0 : index
    %26 = vector.load %arg7[%c40, %c0_15] : memref<108x256xbf16, #tpu.memory_space<vmem>>, vector<4x256xbf16>
    tpu.vector_store %arg7[%c40, %c0_15], %25 {strides = array<i32>} : memref<108x256xbf16, #tpu.memory_space<vmem>>, vector<4x256xbf16>,
    %27 = vector.extract_strided_slice %4 {offsets = [0, 102], sizes = [4, 256], strides = [1, 1]} : vector<4x512xbf16> to vector<4x256xbf16>
    %c44 = arith.constant 44 : index
    %c0_16 = arith.constant 0 : index
    %28 = vector.load %arg7[%c44, %c0_16] : memref<108x256xbf16, #tpu.memory_space<vmem>>, vector<4x256xbf16>
    tpu.vector_store %arg7[%c44, %c0_16], %27 {strides = array<i32>} : memref<108x256xbf16, #tpu.memory_space<vmem>>, vector<4x256xbf16>,
    %29 = vector.extract_strided_slice %4 {offsets = [0, 110], sizes = [4, 256], strides = [1, 1]} : vector<4x512xbf16> to vector<4x256xbf16>
    %c48 = arith.constant 48 : index
    %c0_17 = arith.constant 0 : index
    %30 = vector.load %arg7[%c48, %c0_17] : memref<108x256xbf16, #tpu.memory_space<vmem>>, vector<4x256xbf16>
    tpu.vector_store %arg7[%c48, %c0_17], %29 {strides = array<i32>} : memref<108x256xbf16, #tpu.memory_space<vmem>>, vector<4x256xbf16>,
    %31 = vector.extract_strided_slice %4 {offsets = [0, 111], sizes = [4, 256], strides = [1, 1]} : vector<4x512xbf16> to vector<4x256xbf16>
    %c52 = arith.constant 52 : index
    %c0_18 = arith.constant 0 : index
    %32 = vector.load %arg7[%c52, %c0_18] : memref<108x256xbf16, #tpu.memory_space<vmem>>, vector<4x256xbf16>
    tpu.vector_store %arg7[%c52, %c0_18], %31 {strides = array<i32>} : memref<108x256xbf16, #tpu.memory_space<vmem>>, vector<4x256xbf16>,
    %33 = vector.extract_strided_slice %4 {offsets = [0, 112], sizes = [4, 256], strides = [1, 1]} : vector<4x512xbf16> to vector<4x256xbf16>
    %c56 = arith.constant 56 : index
    %c0_19 = arith.constant 0 : index
    %34 = vector.load %arg7[%c56, %c0_19] : memref<108x256xbf16, #tpu.memory_space<vmem>>, vector<4x256xbf16>
    tpu.vector_store %arg7[%c56, %c0_19], %33 {strides = array<i32>} : memref<108x256xbf16, #tpu.memory_space<vmem>>, vector<4x256xbf16>,
    %35 = vector.extract_strided_slice %4 {offsets = [0, 120], sizes = [4, 256], strides = [1, 1]} : vector<4x512xbf16> to vector<4x256xbf16>
    %c60 = arith.constant 60 : index
    %c0_20 = arith.constant 0 : index
    %36 = vector.load %arg7[%c60, %c0_20] : memref<108x256xbf16, #tpu.memory_space<vmem>>, vector<4x256xbf16>
    tpu.vector_store %arg7[%c60, %c0_20], %35 {strides = array<i32>} : memref<108x256xbf16, #tpu.memory_space<vmem>>, vector<4x256xbf16>,
    %37 = vector.extract_strided_slice %4 {offsets = [0, 121], sizes = [4, 256], strides = [1, 1]} : vector<4x512xbf16> to vector<4x256xbf16>
    %c64 = arith.constant 64 : index
    %c0_21 = arith.constant 0 : index
    %38 = vector.load %arg7[%c64, %c0_21] : memref<108x256xbf16, #tpu.memory_space<vmem>>, vector<4x256xbf16>
    tpu.vector_store %arg7[%c64, %c0_21], %37 {strides = array<i32>} : memref<108x256xbf16, #tpu.memory_space<vmem>>, vector<4x256xbf16>,
    %39 = vector.extract_strided_slice %4 {offsets = [0, 122], sizes = [4, 256], strides = [1, 1]} : vector<4x512xbf16> to vector<4x256xbf16>
    %c68 = arith.constant 68 : index
    %c0_22 = arith.constant 0 : index
    %40 = vector.load %arg7[%c68, %c0_22] : memref<108x256xbf16, #tpu.memory_space<vmem>>, vector<4x256xbf16>
    tpu.vector_store %arg7[%c68, %c0_22], %39 {strides = array<i32>} : memref<108x256xbf16, #tpu.memory_space<vmem>>, vector<4x256xbf16>,
    %41 = vector.extract_strided_slice %4 {offsets = [0, 200], sizes = [4, 256], strides = [1, 1]} : vector<4x512xbf16> to vector<4x256xbf16>
    %c72 = arith.constant 72 : index
    %c0_23 = arith.constant 0 : index
    %42 = vector.load %arg7[%c72, %c0_23] : memref<108x256xbf16, #tpu.memory_space<vmem>>, vector<4x256xbf16>
    tpu.vector_store %arg7[%c72, %c0_23], %41 {strides = array<i32>} : memref<108x256xbf16, #tpu.memory_space<vmem>>, vector<4x256xbf16>,
    %43 = vector.extract_strided_slice %4 {offsets = [0, 201], sizes = [4, 256], strides = [1, 1]} : vector<4x512xbf16> to vector<4x256xbf16>
    %c76 = arith.constant 76 : index
    %c0_24 = arith.constant 0 : index
    %44 = vector.load %arg7[%c76, %c0_24] : memref<108x256xbf16, #tpu.memory_space<vmem>>, vector<4x256xbf16>
    tpu.vector_store %arg7[%c76, %c0_24], %43 {strides = array<i32>} : memref<108x256xbf16, #tpu.memory_space<vmem>>, vector<4x256xbf16>,
    %45 = vector.extract_strided_slice %4 {offsets = [0, 202], sizes = [4, 256], strides = [1, 1]} : vector<4x512xbf16> to vector<4x256xbf16>
    %c80 = arith.constant 80 : index
    %c0_25 = arith.constant 0 : index
    %46 = vector.load %arg7[%c80, %c0_25] : memref<108x256xbf16, #tpu.memory_space<vmem>>, vector<4x256xbf16>
    tpu.vector_store %arg7[%c80, %c0_25], %45 {strides = array<i32>} : memref<108x256xbf16, #tpu.memory_space<vmem>>, vector<4x256xbf16>,
    %47 = vector.extract_strided_slice %4 {offsets = [0, 210], sizes = [4, 256], strides = [1, 1]} : vector<4x512xbf16> to vector<4x256xbf16>
    %c84 = arith.constant 84 : index
    %c0_26 = arith.constant 0 : index
    %48 = vector.load %arg7[%c84, %c0_26] : memref<108x256xbf16, #tpu.memory_space<vmem>>, vector<4x256xbf16>
    tpu.vector_store %arg7[%c84, %c0_26], %47 {strides = array<i32>} : memref<108x256xbf16, #tpu.memory_space<vmem>>, vector<4x256xbf16>,
    %49 = vector.extract_strided_slice %4 {offsets = [0, 211], sizes = [4, 256], strides = [1, 1]} : vector<4x512xbf16> to vector<4x256xbf16>
    %c88 = arith.constant 88 : index
    %c0_27 = arith.constant 0 : index
    %50 = vector.load %arg7[%c88, %c0_27] : memref<108x256xbf16, #tpu.memory_space<vmem>>, vector<4x256xbf16>
    tpu.vector_store %arg7[%c88, %c0_27], %49 {strides = array<i32>} : memref<108x256xbf16, #tpu.memory_space<vmem>>, vector<4x256xbf16>,
    %51 = vector.extract_strided_slice %4 {offsets = [0, 212], sizes = [4, 256], strides = [1, 1]} : vector<4x512xbf16> to vector<4x256xbf16>
    %c92 = arith.constant 92 : index
    %c0_28 = arith.constant 0 : index
    %52 = vector.load %arg7[%c92, %c0_28] : memref<108x256xbf16, #tpu.memory_space<vmem>>, vector<4x256xbf16>
    tpu.vector_store %arg7[%c92, %c0_28], %51 {strides = array<i32>} : memref<108x256xbf16, #tpu.memory_space<vmem>>, vector<4x256xbf16>,
    %53 = vector.extract_strided_slice %4 {offsets = [0, 220], sizes = [4, 256], strides = [1, 1]} : vector<4x512xbf16> to vector<4x256xbf16>
    %c96 = arith.constant 96 : index
    %c0_29 = arith.constant 0 : index
    %54 = vector.load %arg7[%c96, %c0_29] : memref<108x256xbf16, #tpu.memory_space<vmem>>, vector<4x256xbf16>
    tpu.vector_store %arg7[%c96, %c0_29], %53 {strides = array<i32>} : memref<108x256xbf16, #tpu.memory_space<vmem>>, vector<4x256xbf16>,
    %55 = vector.extract_strided_slice %4 {offsets = [0, 221], sizes = [4, 256], strides = [1, 1]} : vector<4x512xbf16> to vector<4x256xbf16>
    %c100 = arith.constant 100 : index
    %c0_30 = arith.constant 0 : index
    %56 = vector.load %arg7[%c100, %c0_30] : memref<108x256xbf16, #tpu.memory_space<vmem>>, vector<4x256xbf16>
    tpu.vector_store %arg7[%c100, %c0_30], %55 {strides = array<i32>} : memref<108x256xbf16, #tpu.memory_space<vmem>>, vector<4x256xbf16>,
    %57 = vector.extract_strided_slice %4 {offsets = [0, 222], sizes = [4, 256], strides = [1, 1]} : vector<4x512xbf16> to vector<4x256xbf16>
    %c104 = arith.constant 104 : index
    %c0_31 = arith.constant 0 : index
    %58 = vector.load %arg7[%c104, %c0_31] : memref<108x256xbf16, #tpu.memory_space<vmem>>, vector<4x256xbf16>
    tpu.vector_store %arg7[%c104, %c0_31], %57 {strides = array<i32>} : memref<108x256xbf16, #tpu.memory_space<vmem>>, vector<4x256xbf16>,
    %c0_32 = arith.constant 0 : index
    %c0_33 = arith.constant 0 : index
    %59 = vector.load %arg3[%c0_32, %c0_33] : memref<8x108xbf16, #tpu.memory_space<vmem>>, vector<8x108xbf16>
    %c0_34 = arith.constant 0 : index
    %c0_35 = arith.constant 0 : index
    %60 = vector.load %arg7[%c0_34, %c0_35] : memref<108x256xbf16, #tpu.memory_space<vmem>>, vector<108x256xbf16>
    %cst = arith.constant dense<0.000000e+00> : vector<8x256xf32>
    %61 = tpu.matmul %59, %60, %cst {dimension_numbers = #tpu.dot_dimension_numbers<[1], [0], [0], [1], [0, 0, 1, 1], [], []>} : vector<8x108xbf16>, vector<108x256xbf16>, vector<8x256xf32> -> vector<8x256xf32>
    %c0_36 = arith.constant 0 : index
    %c0_37 = arith.constant 0 : index
    %62 = vector.load %arg4[%c0_36, %c0_37] : memref<1x256xf32, #tpu.memory_space<vmem>>, vector<1x256xf32>
    %63 = vector.broadcast %62 : vector<1x256xf32> to vector<8x256xf32>
    %64 = arith.mulf %61, %63 : vector<8x256xf32>
    %c0_38 = arith.constant 0 : index
    %c0_39 = arith.constant 0 : index
    %65 = vector.load %arg8[%c0_38, %c0_39] : memref<8x1xf32, #tpu.memory_space<vmem>>, vector<8x1xf32>
    %cst_40 = arith.constant dense<0.000000e+00> : vector<8xf32>
    %66 = vector.multi_reduction <add>, %64, %cst_40 [1] : vector<8x256xf32> to vector<8xf32>
    %67 = vector.shape_cast %66 : vector<8xf32> to vector<8x1xf32>
    %68 = arith.addf %65, %67 : vector<8x1xf32>
    %c0_41 = arith.constant 0 : index
    %c0_42 = arith.constant 0 : index
    %69 = vector.load %arg8[%c0_41, %c0_42] : memref<8x1xf32, #tpu.memory_space<vmem>>, vector<8x1xf32>
    tpu.vector_store %arg8[%c0_41, %c0_42], %68 {strides = array<i32>} : memref<8x1xf32, #tpu.memory_space<vmem>>, vector<8x1xf32>,
    %c0_43 = arith.constant 0 : index
    %c0_44 = arith.constant 0 : index
    %70 = vector.load %arg9[%c0_43, %c0_44] : memref<8x1xf32, #tpu.memory_space<vmem>>, vector<8x1xf32>
    %71 = arith.mulf %61, %64 : vector<8x256xf32>
    %cst_45 = arith.constant dense<0.000000e+00> : vector<8xf32>
    %72 = vector.multi_reduction <add>, %71, %cst_45 [1] : vector<8x256xf32> to vector<8xf32>
    %73 = vector.shape_cast %72 : vector<8xf32> to vector<8x1xf32>
    %74 = arith.addf %70, %73 : vector<8x1xf32>
    %c0_46 = arith.constant 0 : index
    %c0_47 = arith.constant 0 : index
    %75 = vector.load %arg9[%c0_46, %c0_47] : memref<8x1xf32, #tpu.memory_space<vmem>>, vector<8x1xf32>
    tpu.vector_store %arg9[%c0_46, %c0_47], %74 {strides = array<i32>} : memref<8x1xf32, #tpu.memory_space<vmem>>, vector<8x1xf32>,
    %c0_48 = arith.constant 0 : index
    %76 = arith.index_cast %arg1 : i32 to index
    %c0_49 = arith.constant 0 : index
    %c0_50 = arith.constant 0 : index
    %77 = vector.load %arg6[%c0_48, %76, %c0_49, %c0_50] : memref<1x4x8x256xf32, #tpu.memory_space<vmem>>, vector<1x1x8x256xf32>
    %78 = vector.shape_cast %77 : vector<1x1x8x256xf32> to vector<8x256xf32>
    %79 = vector.shape_cast %61 : vector<8x256xf32> to vector<1x1x8x256xf32>
    tpu.vector_store %arg6[%c0_48, %76, %c0_49, %c0_50], %79 {strides = array<i32>} : memref<1x4x8x256xf32, #tpu.memory_space<vmem>>, vector<1x1x8x256xf32>,
    %c3_i32 = arith.constant 3 : i32
    %80 = arith.cmpi eq, %arg1, %c3_i32 : i32
    %81 = arith.extui %80 : i1 to i32
    %c0_i32_51 = arith.constant 0 : i32
    %82 = arith.cmpi ne, %81, %c0_i32_51 : i32
    scf.if %82 {
      %c0_52 = arith.constant 0 : index
      %c0_53 = arith.constant 0 : index
      %83 = vector.load %arg8[%c0_52, %c0_53] : memref<8x1xf32, #tpu.memory_space<vmem>>, vector<8x1xf32>
      %cst_54 = arith.constant 0.001953125 : f32
      %84 = vector.broadcast %cst_54 : f32 to vector<8x1xf32>
      %85 = arith.mulf %83, %84 : vector<8x1xf32>
      %c0_55 = arith.constant 0 : index
      %c0_56 = arith.constant 0 : index
      %86 = vector.load %arg9[%c0_55, %c0_56] : memref<8x1xf32, #tpu.memory_space<vmem>>, vector<8x1xf32>
      %cst_57 = arith.constant 0.001953125 : f32
      %87 = vector.broadcast %cst_57 : f32 to vector<8x1xf32>
      %88 = arith.mulf %86, %87 : vector<8x1xf32>
      %89 = arith.mulf %85, %85 : vector<8x1xf32>
      %90 = arith.subf %88, %89 : vector<8x1xf32>
      %cst_58 = arith.constant 9.99999974E-6 : f32
      %91 = vector.broadcast %cst_58 : f32 to vector<8x1xf32>
      %92 = arith.addf %90, %91 : vector<8x1xf32>
      %93 = math.rsqrt %92 : vector<8x1xf32>
      %c0_59 = arith.constant 0 : index
      %c0_60 = arith.constant 0 : index
      %c0_61 = arith.constant 0 : index
      %c0_62 = arith.constant 0 : index
      %94 = vector.load %arg6[%c0_59, %c0_60, %c0_61, %c0_62] : memref<1x4x8x256xf32, #tpu.memory_space<vmem>>, vector<1x4x8x256xf32>
      %95 = vector.shape_cast %94 : vector<1x4x8x256xf32> to vector<4x8x256xf32>
      %96 = vector.shape_cast %85 : vector<8x1xf32> to vector<1x8x1xf32>
      %97 = vector.broadcast %96 : vector<1x8x1xf32> to vector<4x8x256xf32>
      %98 = arith.subf %95, %97 : vector<4x8x256xf32>
      %99 = vector.shape_cast %93 : vector<8x1xf32> to vector<1x8x1xf32>
      %100 = vector.broadcast %99 : vector<1x8x1xf32> to vector<4x8x256xf32>
      %101 = arith.mulf %98, %100 : vector<4x8x256xf32>
      %c0_63 = arith.constant 0 : index
      %102 = memref.load %arg5[%c0_63] : memref<1xf32, #tpu.memory_space<smem>>
      %cst_64 = arith.constant 0.000000e+00 : f32
      %103 = vector.broadcast %cst_64 : f32 to vector<4x8x256xf32>
      %104 = arith.cmpf oge, %101, %103 : vector<4x8x256xf32>
      %105 = vector.broadcast %102 : f32 to vector<4x8x256xf32>
      %106 = arith.mulf %105, %101 : vector<4x8x256xf32>
      %107 = arith.select %104, %101, %106 : vector<4x8x256xi1>, vector<4x8x256xf32>
      %c0_65 = arith.constant 0 : index
      %c0_66 = arith.constant 0 : index
      %c0_67 = arith.constant 0 : index
      %c0_68 = arith.constant 0 : index
      %108 = vector.load %arg6[%c0_65, %c0_66, %c0_67, %c0_68] : memref<1x4x8x256xf32, #tpu.memory_space<vmem>>, vector<1x4x8x256xf32>
      %109 = vector.shape_cast %108 : vector<1x4x8x256xf32> to vector<4x8x256xf32>
      %110 = vector.shape_cast %107 : vector<4x8x256xf32> to vector<1x4x8x256xf32>
      tpu.vector_store %arg6[%c0_65, %c0_66, %c0_67, %c0_68], %110 {strides = array<i32>} : memref<1x4x8x256xf32, #tpu.memory_space<vmem>>, vector<1x4x8x256xf32>,
    } else {
    }
    return
  }
  func.func @transform_0(%arg0: i32, %arg1: i32) -> (i32, i32, i32, i32) {
    %c0_i32 = arith.constant 0 : i32
    %c0_i32_0 = arith.constant 0 : i32
    %c0_i32_1 = arith.constant 0 : i32
    return %arg0, %arg1, %c0_i32, %c0_i32_0 : i32, i32, i32, i32
  }
  func.func @transform_1(%arg0: i32, %arg1: i32) -> (i32, i32) {
    %c0_i32 = arith.constant 0 : i32
    %c0_i32_0 = arith.constant 0 : i32
    %c0_i32_1 = arith.constant 0 : i32
    return %c0_i32, %c0_i32_0 : i32, i32
  }
  func.func @transform_2(%arg0: i32, %arg1: i32) -> (i32, i32) {
    %c0_i32 = arith.constant 0 : i32
    %c0_i32_0 = arith.constant 0 : i32
    return %c0_i32, %arg1 : i32, i32
  }
  func.func @transform_3(%arg0: i32, %arg1: i32) -> i32 {
    %c0_i32 = arith.constant 0 : i32
    %c0_i32_0 = arith.constant 0 : i32
    return %c0_i32 : i32
  }
  func.func @transform_4(%arg0: i32, %arg1: i32) -> (i32, i32, i32, i32) {
    %c0_i32 = arith.constant 0 : i32
    %c0_i32_0 = arith.constant 0 : i32
    %c0_i32_1 = arith.constant 0 : i32
    %c0_i32_2 = arith.constant 0 : i32
    return %arg0, %c0_i32, %c0_i32_0, %c0_i32_1 : i32, i32, i32, i32
  }
}

</mosaic_0001>

<llo_original>
// kernel: tpu_custom_call.1
$region0: #{tpu_custom_call.1}
  #allocation0 [shape = 'u32[]', space=smem, size = 0x4, offset = 0x4, fixed_abs, tag = 'smem constant byte address 0x4 - core index']
  #allocation1 [shape = 'u32[144,128]{1,0:T(1,128)}', space=vmem, size = 0x12000, scoped, tag = 'internal scratch']
  #allocation2 [shape = 'bf16[108,256]{1,0:T(8,128)(2,1)}', space=vmem, size = 0xe000, scoped, tag = 'scratch operand']
  #allocation3 [shape = 'f32[8,1]{1,0:T(8,128)}', space=vmem, size = 0x1000, scoped, tag = 'scratch operand']
  #allocation4 [shape = 'f32[8,1]{1,0:T(8,128)}', space=vmem, size = 0x1000, scoped, tag = 'scratch operand']
  #allocation5 [shape = 'f32[1]{0:T(128)S(6)}', space=smem, size = 0x200, scoped, tag = 'scoped memory for tpu_custom_call.1']
  %s0 = inlined_call_operand.hbm [shape: bf16[2,4,4,512], index: 0, kind: input, shape index: {}]
  %s1 = inlined_call_operand.hbm [shape: bf16[8,108], index: 1, kind: input, shape index: {}]
  %s2 = inlined_call_operand.hbm [shape: f32[1,1024], index: 2, kind: input, shape index: {}]
  %s3 = inlined_call_operand.<no memory space> [shape: f32[1], index: 3, kind: input, shape index: {}]
  %s4 = inlined_call_operand.hbm [shape: f32[2,4,8,256], index: 4, kind: output, shape index: {}]
  %s5 = sld [smem:[#allocation0]]
  $region69: #{tpu_custom_call.1} parent=0
    _
  %s7 = ssub.s32 1, %s5
  %s8 = scalar_select 0, %s7, %s5
  %9 = sst [smem:[#allocation5]] %s3
  $region1: #{tpu_custom_call.1} parent=0
    #allocation6 [shape = 'u8[8192]{0}', space=vmem, size = 0x2000, scoped, tag = 'input window, operand 0']
    #allocation7 [shape = 's32[2]{0}', space=sflag, size = 0x8, scoped, tag = 'scoped memory for tpu_custom_call.1']
    #allocation8 [shape = 's32[2]{0}', space=sflag, size = 0x8, scoped, tag = 'scoped memory for tpu_custom_call.1']
    #allocation9 [shape = 'u8[2048]{0}', space=vmem, size = 0x800, scoped, tag = 'input window, operand 1, single buffered']
    #allocation10 [shape = 's32[1]{0}', space=sflag, size = 0x4, scoped, tag = 'scoped memory for tpu_custom_call.1']
    #allocation11 [shape = 'u8[2048]{0}', space=vmem, size = 0x800, scoped, tag = 'input window, operand 2']
    #allocation12 [shape = 'u8[65536]{0}', space=vmem, size = 0x10000, scoped, tag = 'output window, operand 0']
    %10 = vsyncpa [#allocation7], 0
    %s11 = scalar_lea.sflag [#allocation7], 1
    %12 = vsyncpa %s11, 0
    %13 = vsyncpa [#allocation10], 0
    %14 = vsyncpa [#allocation8], 0
    %s15 = scalar_lea.sflag [#allocation8], 1
    %16 = vsyncpa %s15, 0
    loop: start=0, step=1, limit=10
    $region2: #{tpu_custom_call.1} parent=1 // loop_pre_header
      _
    $region3: #{tpu_custom_call.1} parent=1 // loop_header
      %s18 = sphi 0, %s22
      %p19 = scmp.ge.s32.totalorder %s18, 10
      %s25 = sphi 0, %s37
      %s26 = sphi 0, %s33
      %s27 = sphi 0, %s25
      %s28 = sphi 0, %s26
      %s29 = sphi 0, %s27
      %s30 = sphi 0, %s28
      %s42 = sphi 0, %s44
      %s45 = sphi 0, %s42
      %s46 = sphi 0, %s45
      %s62 = sphi 0, %s46
      %s66 = sphi 0, %s66
      %s68 = sphi 0, %s66
      %s69 = sphi 0, %s68
      %s83 = sphi 0, %s69
      %s89 = sphi 0, %s91
      %s92 = sphi 0, %s89
      %s93 = sphi 0, %s92
      %s109 = sphi 0, %s93
      %s113 = sphi 0, %s113
      %s115 = sphi 0, %s113
      %s116 = sphi 0, %s115
      %s130 = sphi 0, %s116
      %s136 = sphi 0, %s138
      %s139 = sphi 0, %s136
      %s140 = sphi 0, %s139
      %s156 = sphi 0, %s140
    $region4: #{tpu_custom_call.1} parent=1 // loop_header_branch
      %21 = sbr.rel (%p19) target = $region8
    $region5: #{tpu_custom_call.1} parent=1 // loop_body
      %s23 = ssub.s32 %s18, 1
      %s24 = ssub.s32 %s18, 2
      %s31 = sadd.s32 1, %s26
      %p32 = scmp.ge.s32.totalorder %s31, 4
      %s33 = scalar_select %p32, 0, %s31
      %s34 = sadd.s32 1, %s25
      %s35 = scalar_select %p32, %s34, %s25
      %p36 = scmp.ge.s32.totalorder %s35, 2
      %s37 = scalar_select %p36, 0, %s35
      %s38 = ssub.s32 %s25, %s37
      %s39 = ssub.s32 %s26, %s33
      %s40 = sor.u32 %s38, %s39
      %p41 = scmp.eq.s32.totalorder %s40, 0
      %s43 = sadd.s32 %s42, 1
      %s44 = scalar_select %p41, %s42, %s43
      %p47 = pneg %p41
      %p48 = scmp.eq.s32.totalorder %s18, 7
      %p49 = por %p47, %p48
      %p50 = scmp.ne.s32.totalorder %s42, %s45
      %p51 = scmp.eq.s32.totalorder %s18, 0
      %p52 = por %p50, %p51
      %p53 = scmp.ne.s32.totalorder %s42, %s45
      %p54 = scmp.eq.s32.totalorder %s23, 7
      %p55 = por %p53, %p54
      %p56 = scmp.ne.s32.totalorder %s45, %s46
      %p57 = scmp.eq.s32.totalorder %s23, 0
      %p58 = por %p56, %p57
      %p59 = scmp.ne.s32.totalorder %s45, %s46
      %p60 = scmp.eq.s32.totalorder %s24, 7
      %p61 = por %p59, %p60
      %p63 = scmp.ne.s32.totalorder %s46, %s62
      %p64 = scmp.eq.s32.totalorder %s24, 0
      %p65 = por %p63, %p64
      %s67 = sadd.s32 %s66, 1
      %p70 = scmp.eq.s32.totalorder %s18, 7
      %p71 = scmp.ne.s32.totalorder %s66, %s68
      %p72 = scmp.eq.s32.totalorder %s18, 0
      %p73 = por %p71, %p72
      %p74 = scmp.ne.s32.totalorder %s66, %s68
      %p75 = scmp.eq.s32.totalorder %s23, 7
      %p76 = por %p74, %p75
      %p77 = scmp.ne.s32.totalorder %s68, %s69
      %p78 = scmp.eq.s32.totalorder %s23, 0
      %p79 = por %p77, %p78
      %p80 = scmp.ne.s32.totalorder %s68, %s69
      %p81 = scmp.eq.s32.totalorder %s24, 7
      %p82 = por %p80, %p81
      %p84 = scmp.ne.s32.totalorder %s69, %s83
      %p85 = scmp.eq.s32.totalorder %s24, 0
      %p86 = por %p84, %p85
      %s87 = ssub.s32 %s26, %s33
      %p88 = scmp.eq.s32.totalorder %s87, 0
      %s90 = sadd.s32 %s89, 1
      %s91 = scalar_select %p88, %s89, %s90
      %p94 = pneg %p88
      %p95 = scmp.eq.s32.totalorder %s18, 7
      %p96 = por %p94, %p95
      %p97 = scmp.ne.s32.totalorder %s89, %s92
      %p98 = scmp.eq.s32.totalorder %s18, 0
      %p99 = por %p97, %p98
      %p100 = scmp.ne.s32.totalorder %s89, %s92
      %p101 = scmp.eq.s32.totalorder %s23, 7
      %p102 = por %p100, %p101
      %p103 = scmp.ne.s32.totalorder %s92, %s93
      %p104 = scmp.eq.s32.totalorder %s23, 0
      %p105 = por %p103, %p104
      %p106 = scmp.ne.s32.totalorder %s92, %s93
      %p107 = scmp.eq.s32.totalorder %s24, 7
      %p108 = por %p106, %p107
      %p110 = scmp.ne.s32.totalorder %s93, %s109
      %p111 = scmp.eq.s32.totalorder %s24, 0
      %p112 = por %p110, %p111
      %s114 = sadd.s32 %s113, 1
      %p117 = scmp.eq.s32.totalorder %s18, 7
      %p118 = scmp.ne.s32.totalorder %s113, %s115
      %p119 = scmp.eq.s32.totalorder %s18, 0
      %p120 = por %p118, %p119
      %p121 = scmp.ne.s32.totalorder %s113, %s115
      %p122 = scmp.eq.s32.totalorder %s23, 7
      %p123 = por %p121, %p122
      %p124 = scmp.ne.s32.totalorder %s115, %s116
      %p125 = scmp.eq.s32.totalorder %s23, 0
      %p126 = por %p124, %p125
      %p127 = scmp.ne.s32.totalorder %s115, %s116
      %p128 = scmp.eq.s32.totalorder %s24, 7
      %p129 = por %p127, %p128
      %p131 = scmp.ne.s32.totalorder %s116, %s130
      %p132 = scmp.eq.s32.totalorder %s24, 0
      %p133 = por %p131, %p132
      %s134 = ssub.s32 %s25, %s37
      %p135 = scmp.eq.s32.totalorder %s134, 0
      %s137 = sadd.s32 %s136, 1
      %s138 = scalar_select %p135, %s136, %s137
      %p141 = pneg %p135
      %p142 = scmp.eq.s32.totalorder %s18, 7
      %p143 = por %p141, %p142
      %p144 = scmp.ne.s32.totalorder %s136, %s139
      %p145 = scmp.eq.s32.totalorder %s18, 0
      %p146 = por %p144, %p145
      %p147 = scmp.ne.s32.totalorder %s136, %s139
      %p148 = scmp.eq.s32.totalorder %s23, 7
      %p149 = por %p147, %p148
      %p150 = scmp.ne.s32.totalorder %s139, %s140
      %p151 = scmp.eq.s32.totalorder %s23, 0
      %p152 = por %p150, %p151
      %p153 = scmp.ne.s32.totalorder %s139, %s140
      %p154 = scmp.eq.s32.totalorder %s24, 7
      %p155 = por %p153, %p154
      %p157 = scmp.ne.s32.totalorder %s140, %s156
      %p158 = scmp.eq.s32.totalorder %s24, 0
      %p159 = por %p157, %p158
      %p160 = scmp.le.s32.totalorder 1, %s18
      %p161 = scmp.lt.s32.totalorder %s18, 9
      %p162 = pnand %p160, %p161
      %p163 = pneg %p162
      // Predicated region
      $region9: #{tpu_custom_call.1} parent=5 // pred_check
        _
      $region10: #{tpu_custom_call.1} parent=5 // pred_check_branch
        %165 = sbr.rel (%p162) target = $region12
      $region11: #{tpu_custom_call.1} parent=5 // pred_region
        %s166 = ssub.s32 %s18, 1
        // Predicated region
        $region13: #{tpu_custom_call.1} parent=11 // pred_check
          %p167 = pneg %p79
        $region14: #{tpu_custom_call.1} parent=11 // pred_check_branch
          %169 = sbr.rel (%p167) target = $region16
        $region15: #{tpu_custom_call.1} parent=11 // pred_region
          %s171 = ssub.s32 64, 64
          %172 = vsyncadd [#allocation10], %s171
          %s174 = sshll.u32 [#allocation9], 4
          %s175 = int_to_ptr.vmem [resolvable:$true] %s174
          %177 = dma.hbm_to_vmem [thread:$0]  %s1, 64, %s175, [#allocation10]
        $region16: #{tpu_custom_call.1} parent=11 // pred_fallthru
          _
        // Predicated region
        $region17: #{tpu_custom_call.1} parent=11 // pred_check
          %p178 = pneg %p126
        $region18: #{tpu_custom_call.1} parent=11 // pred_check_branch
          %180 = sbr.rel (%p178) target = $region20
        $region19: #{tpu_custom_call.1} parent=11 // pred_region
          _
        $region20: #{tpu_custom_call.1} parent=11 // pred_fallthru
          _
      $region12: #{tpu_custom_call.1} parent=5 // pred_fallthru
        _
      %p181 = scmp.lt.s32.totalorder %s18, 8
      // Predicated region
      $region21: #{tpu_custom_call.1} parent=5 // pred_check
        %p182 = pneg %p181
      $region22: #{tpu_custom_call.1} parent=5 // pred_check_branch
        %184 = sbr.rel (%p182) target = $region24
      $region23: #{tpu_custom_call.1} parent=5 // pred_region
        // Predicated region
        $region25: #{tpu_custom_call.1} parent=23 // pred_check
          %p185 = pneg %p52
        $region26: #{tpu_custom_call.1} parent=23 // pred_check_branch
          %187 = sbr.rel (%p185) target = $region28
        $region27: #{tpu_custom_call.1} parent=23 // pred_region
          %s188 = sand.u32 %s18, 1
          %s189 = scalar_lea.sflag [#allocation7], %s188
          %s190 = sand.u32 %s42, 1
          %s191 = smul.addr %s190, 8
          %s192 = scalar_lea.vmem [#allocation6], %s191
          %s194 = ssub.s32 128, 128
          %195 = vsyncadd %s189, %s194
          %s196 = smul.addr %s26, 4
          %s197 = smul.addr %s25, 16
          %s198 = sadd.s32 %s196, %s197
          %s199 = smul.addr %s198, 32
          %s200 = scalar_lea.hbm %s0, %s199
          %s202 = sshll.u32 %s192, 4
          %s203 = int_to_ptr.vmem [resolvable:$true] %s202
          %205 = dma.hbm_to_vmem [thread:$0]  %s200, 128, %s203, %s189
        $region28: #{tpu_custom_call.1} parent=23 // pred_fallthru
          _
        // Predicated region
        $region29: #{tpu_custom_call.1} parent=23 // pred_check
          %p206 = pneg %p99
        $region30: #{tpu_custom_call.1} parent=23 // pred_check_branch
          %208 = sbr.rel (%p206) target = $region32
        $region31: #{tpu_custom_call.1} parent=23 // pred_region
          %s209 = sand.u32 %s18, 1
          %s210 = scalar_lea.sflag [#allocation7], %s209
          %s211 = sand.u32 %s89, 1
          %s212 = smul.addr %s211, 2
          %s213 = scalar_lea.vmem [#allocation11], %s212
          %s214 = smul.u32 2, %s26
          %s216 = ssub.s32 32, 32
          %217 = vsyncadd %s210, %s216
          %s218 = smul.addr %s214, 16
          %s219 = scalar_lea.hbm %s2, %s218
          %s221 = sshll.u32 %s213, 4
          %s222 = int_to_ptr.vmem [resolvable:$true] %s221
          %224 = dma.hbm_to_vmem [thread:$0]  %s219, 32, %s222, %s210
        $region32: #{tpu_custom_call.1} parent=23 // pred_fallthru
          _
      $region24: #{tpu_custom_call.1} parent=5 // pred_fallthru
        _
      %p225 = scmp.le.s32.totalorder 1, %s18
      %p226 = scmp.lt.s32.totalorder %s18, 9
      %p227 = pnand %p225, %p226
      %p228 = pneg %p227
      // Predicated region
      $region33: #{tpu_custom_call.1} parent=5 // pred_check
        _
      $region34: #{tpu_custom_call.1} parent=5 // pred_check_branch
        %230 = sbr.rel (%p227) target = $region36
      $region35: #{tpu_custom_call.1} parent=5 // pred_region
        %s231 = ssub.s32 %s18, 1
        %s232 = sand.u32 %s23, 1
        %s233 = scalar_lea.sflag [#allocation7], %s232
        %s234 = sand.u32 %s45, 1
        %s235 = smul.addr %s234, 8
        %s236 = scalar_lea.vmem [#allocation6], %s235
        // Predicated region
        $region37: #{tpu_custom_call.1} parent=35 // pred_check
          %p237 = pneg %p58
        $region38: #{tpu_custom_call.1} parent=35 // pred_check_branch
          %239 = sbr.rel (%p237) target = $region40
        $region39: #{tpu_custom_call.1} parent=35 // pred_region
          %240 = dma.done %s233, 128
        $region40: #{tpu_custom_call.1} parent=35 // pred_fallthru
          _
        // Predicated region
        $region41: #{tpu_custom_call.1} parent=35 // pred_check
          %p241 = pneg %p79
        $region42: #{tpu_custom_call.1} parent=35 // pred_check_branch
          %243 = sbr.rel (%p241) target = $region44
        $region43: #{tpu_custom_call.1} parent=35 // pred_region
          %244 = dma.done [#allocation10], 64
        $region44: #{tpu_custom_call.1} parent=35 // pred_fallthru
          _
        %s245 = sand.u32 %s23, 1
        %s246 = scalar_lea.sflag [#allocation7], %s245
        %s247 = sand.u32 %s92, 1
        %s248 = smul.addr %s247, 2
        %s249 = scalar_lea.vmem [#allocation11], %s248
        // Predicated region
        $region45: #{tpu_custom_call.1} parent=35 // pred_check
          %p250 = pneg %p105
        $region46: #{tpu_custom_call.1} parent=35 // pred_check_branch
          %252 = sbr.rel (%p250) target = $region48
        $region47: #{tpu_custom_call.1} parent=35 // pred_region
          %253 = dma.done %s246, 32
        $region48: #{tpu_custom_call.1} parent=35 // pred_fallthru
          _
        %s254 = sand.u32 %s23, 1
        %s255 = scalar_lea.sflag [#allocation7], %s254
        %s256 = sand.u32 %s45, 1
        %s257 = smul.addr %s256, 8
        %s258 = scalar_lea.vmem [#allocation6], %s257
        %p259 = pneg %p58
        %p260 = pneg %p55
        %p261 = pneg %p79
        %p262 = pneg %p76
        %s263 = sand.u32 %s23, 1
        %s264 = scalar_lea.sflag [#allocation7], %s263
        %s265 = sand.u32 %s92, 1
        %s266 = smul.addr %s265, 2
        %s267 = scalar_lea.vmem [#allocation11], %s266
        %p268 = pneg %p105
        %p269 = pneg %p102
        %p270 = pneg %p126
        %p271 = pneg %p123
        %p272 = pneg %p152
        %p273 = pneg %p149
        %s274 = sand.u32 %s139, 1
        %s275 = scalar_lea.sflag [#allocation8], %s274
        %s276 = sand.u32 %s139, 1
        %s277 = smul.addr %s276, 64
        %s278 = scalar_lea.vmem [#allocation12], %s277
        %s279 = smul.u32 2, %s28
        %p281 = scmp.eq.s32.totalorder %s28, 0
        // Predicated region
        $region49: #{tpu_custom_call.1} parent=35 // pred_check
          %p282 = pneg %p281
        $region50: #{tpu_custom_call.1} parent=35 // pred_check_branch
          %284 = sbr.rel (%p282) target = $region52
        $region51: #{tpu_custom_call.1} parent=35 // pred_region
          %vm285 = vcmask 7168
          %286 = vst.msk [vmem:[#allocation3] sm:$0xff] %vm285, 0.0
          %287 = vst.msk [vmem:[#allocation4] sm:$0xff] %vm285, 0.0
        $region52: #{tpu_custom_call.1} parent=35 // pred_fallthru
          _
        %v288 = vld [vmem:[%s236] sm:$0xff]
        %v291 = vunpack.c.l.s4 1983009808
        %v292 = vunpack.c.0.s8 %v291
        %v293 = vlaneseq
        %v294 = vshrl.u32 %v293, 7
        %v295 = vsub.s32 %v292, %v294
        %v296 = vrot.slane %v288, %v295
        %298 = vst [vmem:[#allocation2] sm:$0x33] %v296
        %v299 = vcombine.low %v288, %v288
        %v301 = vunpack.c.l.s4 1983009808
        %v302 = vunpack.c.0.s8 %v301
        %v303 = vlaneseq
        %v304 = vshrl.u32 %v303, 7
        %v305 = vsub.s32 %v302, %v304
        %v306 = vrot.slane %v299, %v305
        %307 = vrot.lane.b32.xlu0 %v306, 127
        %v308 = vpop.permute.xlu0 %307
        %309 = vrot.lane.b32.xlu0 %v296, 127
        %v310 = vpop.permute.xlu0 %309
        %v311 = vrot.slane %v308, 4
        %v312 = vrot.slane %v310, 4
        %vm313 = vcmask 1043456
        %v314 = vsel %vm313, %v311, %v312
        %vm315 = vcmask 1039360
        %v316 = vsel %vm315, %v308, %v314
        %318 = vst [vmem:[#allocation2] sm:$0xcc] %v316
        %v319 = vcombine.high %v288, %v288
        %v321 = vunpack.c.l.s4 1983009808
        %v322 = vunpack.c.0.s8 %v321
        %v323 = vlaneseq
        %v324 = vshrl.u32 %v323, 7
        %v325 = vsub.s32 %v322, %v324
        %v326 = vrot.slane %v319, %v325
        %327 = vrot.lane.b32.xlu0 %v296, 126
        %v328 = vpop.permute.xlu0 %327
        %329 = vrot.lane.b32.xlu0 %v326, 126
        %v330 = vpop.permute.xlu0 %329
        %v331 = vrot.slane %v328, 4
        %v332 = vrot.slane %v330, 4
        %v333 = vsel %vm313, %v331, %v332
        %vm334 = vcmask 1031168
        %v335 = vsel %vm334, %v328, %v333
        %337 = vst [vmem:[#allocation2 + $0x8] sm:$0x33] %v335
        %338 = vrot.lane.b32.xlu0 %v306, 118
        %v339 = vpop.permute.xlu0 %338
        %340 = vrot.lane.b32.xlu0 %v296, 118
        %v341 = vpop.permute.xlu0 %340
        %v342 = vrot.slane %v339, 4
        %v343 = vrot.slane %v341, 4
        %v344 = vsel %vm313, %v342, %v343
        %vm345 = vcmask 965632
        %v346 = vsel %vm345, %v339, %v344
        %348 = vst [vmem:[#allocation2 + $0x8] sm:$0xcc] %v346
        %349 = vrot.lane.b32.xlu0 %v296, 117
        %v350 = vpop.permute.xlu0 %349
        %351 = vrot.lane.b32.xlu0 %v326, 117
        %v352 = vpop.permute.xlu0 %351
        %v353 = vrot.slane %v350, 4
        %v354 = vrot.slane %v352, 4
        %v355 = vsel %vm313, %v353, %v354
        %vm356 = vcmask 957440
        %v357 = vsel %vm356, %v350, %v355
        %359 = vst [vmem:[#allocation2 + $0x10] sm:$0x33] %v357
        %360 = vrot.lane.b32.xlu0 %v306, 116
        %v361 = vpop.permute.xlu0 %360
        %362 = vrot.lane.b32.xlu0 %v296, 116
        %v363 = vpop.permute.xlu0 %362
        %v364 = vrot.slane %v361, 4
        %v365 = vrot.slane %v363, 4
        %v366 = vsel %vm313, %v364, %v365
        %vm367 = vcmask 949248
        %v368 = vsel %vm367, %v361, %v366
        %370 = vst [vmem:[#allocation2 + $0x10] sm:$0xcc] %v368
        %371 = vrot.lane.b32.xlu0 %v296, 108
        %v372 = vpop.permute.xlu0 %371
        %373 = vrot.lane.b32.xlu0 %v326, 108
        %v374 = vpop.permute.xlu0 %373
        %v375 = vrot.slane %v372, 4
        %v376 = vrot.slane %v374, 4
        %v377 = vsel %vm313, %v375, %v376
        %vm378 = vcmask 883712
        %v379 = vsel %vm378, %v372, %v377
        %381 = vst [vmem:[#allocation2 + $0x18] sm:$0x33] %v379
        %382 = vrot.lane.b32.xlu0 %v306, 107
        %v383 = vpop.permute.xlu0 %382
        %384 = vrot.lane.b32.xlu0 %v296, 107
        %v385 = vpop.permute.xlu0 %384
        %v386 = vrot.slane %v383, 4
        %v387 = vrot.slane %v385, 4
        %v388 = vsel %vm313, %v386, %v387
        %vm389 = vcmask 875520
        %v390 = vsel %vm389, %v383, %v388
        %392 = vst [vmem:[#allocation2 + $0x18] sm:$0xcc] %v390
        %393 = vrot.lane.b32.xlu0 %v296, 106
        %v394 = vpop.permute.xlu0 %393
        %395 = vrot.lane.b32.xlu0 %v326, 106
        %v396 = vpop.permute.xlu0 %395
        %v397 = vrot.slane %v394, 4
        %v398 = vrot.slane %v396, 4
        %v399 = vsel %vm313, %v397, %v398
        %vm400 = vcmask 867328
        %v401 = vsel %vm400, %v394, %v399
        %403 = vst [vmem:[#allocation2 + $0x20] sm:$0x33] %v401
        %404 = vrot.lane.b32.xlu0 %v306, 28
        %v405 = vpop.permute.xlu0 %404
        %406 = vrot.lane.b32.xlu0 %v296, 28
        %v407 = vpop.permute.xlu0 %406
        %v408 = vrot.slane %v405, 4
        %v409 = vrot.slane %v407, 4
        %v410 = vsel %vm313, %v408, %v409
        %vm411 = vcmask 228352
        %v412 = vsel %vm411, %v405, %v410
        %414 = vst [vmem:[#allocation2 + $0x20] sm:$0xcc] %v412
        %415 = vrot.lane.b32.xlu0 %v296, 27
        %v416 = vpop.permute.xlu0 %415
        %417 = vrot.lane.b32.xlu0 %v326, 27
        %v418 = vpop.permute.xlu0 %417
        %v419 = vrot.slane %v416, 4
        %v420 = vrot.slane %v418, 4
        %v421 = vsel %vm313, %v419, %v420
        %vm422 = vcmask 220160
        %v423 = vsel %vm422, %v416, %v421
        %425 = vst [vmem:[#allocation2 + $0x28] sm:$0x33] %v423
        %426 = vrot.lane.b32.xlu0 %v306, 26
        %v427 = vpop.permute.xlu0 %426
        %428 = vrot.lane.b32.xlu0 %v296, 26
        %v429 = vpop.permute.xlu0 %428
        %v430 = vrot.slane %v427, 4
        %v431 = vrot.slane %v429, 4
        %v432 = vsel %vm313, %v430, %v431
        %vm433 = vcmask 211968
        %v434 = vsel %vm433, %v427, %v432
        %436 = vst [vmem:[#allocation2 + $0x28] sm:$0xcc] %v434
        %437 = vrot.lane.b32.xlu0 %v296, 18
        %v438 = vpop.permute.xlu0 %437
        %439 = vrot.lane.b32.xlu0 %v326, 18
        %v440 = vpop.permute.xlu0 %439
        %v441 = vrot.slane %v438, 4
        %v442 = vrot.slane %v440, 4
        %v443 = vsel %vm313, %v441, %v442
        %vm444 = vcmask 146432
        %v445 = vsel %vm444, %v438, %v443
        %447 = vst [vmem:[#allocation2 + $0x30] sm:$0x33] %v445
        %448 = vrot.lane.b32.xlu0 %v306, 17
        %v449 = vpop.permute.xlu0 %448
        %450 = vrot.lane.b32.xlu0 %v296, 17
        %v451 = vpop.permute.xlu0 %450
        %v452 = vrot.slane %v449, 4
        %v453 = vrot.slane %v451, 4
        %v454 = vsel %vm313, %v452, %v453
        %vm455 = vcmask 138240
        %v456 = vsel %vm455, %v449, %v454
        %458 = vst [vmem:[#allocation2 + $0x30] sm:$0xcc] %v456
        %459 = vrot.lane.b32.xlu0 %v296, 16
        %v460 = vpop.permute.xlu0 %459
        %461 = vrot.lane.b32.xlu0 %v326, 16
        %v462 = vpop.permute.xlu0 %461
        %v463 = vrot.slane %v460, 4
        %v464 = vrot.slane %v462, 4
        %v465 = vsel %vm313, %v463, %v464
        %vm466 = vcmask 130048
        %v467 = vsel %vm466, %v460, %v465
        %469 = vst [vmem:[#allocation2 + $0x38] sm:$0x33] %v467
        %470 = vrot.lane.b32.xlu0 %v306, 8
        %v471 = vpop.permute.xlu0 %470
        %472 = vrot.lane.b32.xlu0 %v296, 8
        %v473 = vpop.permute.xlu0 %472
        %v474 = vrot.slane %v471, 4
        %v475 = vrot.slane %v473, 4
        %v476 = vsel %vm313, %v474, %v475
        %vm477 = vcmask 64512
        %v478 = vsel %vm477, %v471, %v476
        %480 = vst [vmem:[#allocation2 + $0x38] sm:$0xcc] %v478
        %481 = vrot.lane.b32.xlu0 %v296, 7
        %v482 = vpop.permute.xlu0 %481
        %483 = vrot.lane.b32.xlu0 %v326, 7
        %v484 = vpop.permute.xlu0 %483
        %v485 = vrot.slane %v482, 4
        %v486 = vrot.slane %v484, 4
        %v487 = vsel %vm313, %v485, %v486
        %vm488 = vcmask 56320
        %v489 = vsel %vm488, %v482, %v487
        %491 = vst [vmem:[#allocation2 + $0x40] sm:$0x33] %v489
        %492 = vrot.lane.b32.xlu0 %v306, 6
        %v493 = vpop.permute.xlu0 %492
        %494 = vrot.lane.b32.xlu0 %v296, 6
        %v495 = vpop.permute.xlu0 %494
        %v496 = vrot.slane %v493, 4
        %v497 = vrot.slane %v495, 4
        %v498 = vsel %vm313, %v496, %v497
        %vm499 = vcmask 48128
        %v500 = vsel %vm499, %v493, %v498
        %502 = vst [vmem:[#allocation2 + $0x40] sm:$0xcc] %v500
        %503 = vrot.lane.b32.xlu0 %v296, 56
        %v504 = vpop.permute.xlu0 %503
        %505 = vrot.lane.b32.xlu0 %v326, 56
        %v506 = vpop.permute.xlu0 %505
        %v507 = vrot.slane %v504, 4
        %v508 = vrot.slane %v506, 4
        %v509 = vsel %vm313, %v507, %v508
        %vm510 = vcmask 457728
        %v511 = vsel %vm510, %v509, %v506
        %513 = vst [vmem:[#allocation2 + $0x48] sm:$0x33] %v511
        %514 = vrot.lane.b32.xlu0 %v306, 55
        %v515 = vpop.permute.xlu0 %514
        %516 = vrot.lane.b32.xlu0 %v296, 55
        %v517 = vpop.permute.xlu0 %516
        %v518 = vrot.slane %v515, 4
        %v519 = vrot.slane %v517, 4
        %v520 = vsel %vm313, %v518, %v519
        %vm521 = vcmask 449536
        %v522 = vsel %vm521, %v520, %v517
        %524 = vst [vmem:[#allocation2 + $0x48] sm:$0xcc] %v522
        %525 = vrot.lane.b32.xlu0 %v296, 54
        %v526 = vpop.permute.xlu0 %525
        %527 = vrot.lane.b32.xlu0 %v326, 54
        %v528 = vpop.permute.xlu0 %527
        %v529 = vrot.slane %v526, 4
        %v530 = vrot.slane %v528, 4
        %v531 = vsel %vm313, %v529, %v530
        %vm532 = vcmask 441344
        %v533 = vsel %vm532, %v531, %v528
        %535 = vst [vmem:[#allocation2 + $0x50] sm:$0x33] %v533
        %536 = vrot.lane.b32.xlu0 %v306, 46
        %v537 = vpop.permute.xlu0 %536
        %538 = vrot.lane.b32.xlu0 %v296, 46
        %v539 = vpop.permute.xlu0 %538
        %v540 = vrot.slane %v537, 4
        %v541 = vrot.slane %v539, 4
        %v542 = vsel %vm313, %v540, %v541
        %vm543 = vcmask 375808
        %v544 = vsel %vm543, %v542, %v539
        %546 = vst [vmem:[#allocation2 + $0x50] sm:$0xcc] %v544
        %547 = vrot.lane.b32.xlu0 %v296, 45
        %v548 = vpop.permute.xlu0 %547
        %549 = vrot.lane.b32.xlu0 %v326, 45
        %v550 = vpop.permute.xlu0 %549
        %v551 = vrot.slane %v548, 4
        %v552 = vrot.slane %v550, 4
        %v553 = vsel %vm313, %v551, %v552
        %vm554 = vcmask 367616
        %v555 = vsel %vm554, %v553, %v550
        %557 = vst [vmem:[#allocation2 + $0x58] sm:$0x33] %v555
        %558 = vrot.lane.b32.xlu0 %v306, 44
        %v559 = vpop.permute.xlu0 %558
        %560 = vrot.lane.b32.xlu0 %v296, 44
        %v561 = vpop.permute.xlu0 %560
        %v562 = vrot.slane %v559, 4
        %v563 = vrot.slane %v561, 4
        %v564 = vsel %vm313, %v562, %v563
        %vm565 = vcmask 359424
        %v566 = vsel %vm565, %v564, %v561
        %568 = vst [vmem:[#allocation2 + $0x58] sm:$0xcc] %v566
        %569 = vrot.lane.b32.xlu0 %v296, 36
        %v570 = vpop.permute.xlu0 %569
        %571 = vrot.lane.b32.xlu0 %v326, 36
        %v572 = vpop.permute.xlu0 %571
        %v573 = vrot.slane %v570, 4
        %v574 = vrot.slane %v572, 4
        %v575 = vsel %vm313, %v573, %v574
        %vm576 = vcmask 293888
        %v577 = vsel %vm576, %v575, %v572
        %579 = vst [vmem:[#allocation2 + $0x60] sm:$0x33] %v577
        %580 = vrot.lane.b32.xlu0 %v306, 35
        %v581 = vpop.permute.xlu0 %580
        %582 = vrot.lane.b32.xlu0 %v296, 35
        %v583 = vpop.permute.xlu0 %582
        %v584 = vrot.slane %v581, 4
        %v585 = vrot.slane %v583, 4
        %v586 = vsel %vm313, %v584, %v585
        %vm587 = vcmask 285696
        %v588 = vsel %vm587, %v586, %v583
        %590 = vst [vmem:[#allocation2 + $0x60] sm:$0xcc] %v588
        %591 = vrot.lane.b32.xlu0 %v296, 34
        %v592 = vpop.permute.xlu0 %591
        %593 = vrot.lane.b32.xlu0 %v326, 34
        %v594 = vpop.permute.xlu0 %593
        %v595 = vrot.slane %v592, 4
        %v596 = vrot.slane %v594, 4
        %v597 = vsel %vm313, %v595, %v596
        %vm598 = vcmask 277504
        %v599 = vsel %vm598, %v597, %v594
        %601 = vst [vmem:[#allocation2 + $0x68] sm:$0x33] %v599
        %v602 = vld [vmem:[#allocation9] sm:$0xf]
        %v603 = vld [vmem:[#allocation2] sm:$0xff]
        %v604 = vld [vmem:[#allocation2 + $0x8] sm:$0xff]
        %v605 = vld [vmem:[#allocation2 + $0x10] sm:$0xff]
        %v606 = vld [vmem:[#allocation2 + $0x18] sm:$0xff]
        %v607 = vld [vmem:[#allocation2 + $0x20] sm:$0xff]
        %v608 = vld [vmem:[#allocation2 + $0x28] sm:$0xff]
        %v609 = vld [vmem:[#allocation2 + $0x30] sm:$0xff]
        %v610 = vld [vmem:[#allocation2 + $0x38] sm:$0xff]
        %v611 = vld [vmem:[#allocation2 + $0x40] sm:$0xff]
        %v612 = vld [vmem:[#allocation2 + $0x48] sm:$0xff]
        %v613 = vld [vmem:[#allocation2 + $0x50] sm:$0xff]
        %v614 = vld [vmem:[#allocation2 + $0x58] sm:$0xff]
        %v615 = vld [vmem:[#allocation2 + $0x60] sm:$0xff]
        %v616 = vld [vmem:[#allocation2 + $0x68] sm:$0x33]
        %v631 = vunpack.c.l.b16 %v603
        %v632 = vunpack.c.h.b16 %v603
        %v633 = vunpack.c.l.b16 %v604
        %v634 = vunpack.c.h.b16 %v604
        %v635 = vunpack.c.l.b16 %v605
        %v636 = vunpack.c.h.b16 %v605
        %v637 = vunpack.c.l.b16 %v606
        %v638 = vunpack.c.h.b16 %v606
        %v639 = vunpack.c.l.b16 %v607
        %v640 = vunpack.c.h.b16 %v607
        %v641 = vunpack.c.l.b16 %v608
        %v642 = vunpack.c.h.b16 %v608
        %v643 = vunpack.c.l.b16 %v609
        %v644 = vunpack.c.h.b16 %v609
        %v645 = vunpack.c.l.b16 %v610
        %v646 = vunpack.c.h.b16 %v610
        %v647 = vunpack.c.l.b16 %v611
        %v648 = vunpack.c.h.b16 %v611
        %v649 = vunpack.c.l.b16 %v612
        %v650 = vunpack.c.h.b16 %v612
        %v651 = vunpack.c.l.b16 %v613
        %v652 = vunpack.c.h.b16 %v613
        %v653 = vunpack.c.l.b16 %v614
        %v654 = vunpack.c.h.b16 %v614
        %v655 = vunpack.c.l.b16 %v615
        %v656 = vunpack.c.h.b16 %v615
        %v657 = vunpack.c.l.b16 %v616
        %v658 = vunpack.c.h.b16 %v616
        %v659 = vpack.c.b16 %v633, %v631
        %v660 = vpack.c.b16 %v634, %v632
        %v661 = vpack.c.b16 %v637, %v635
        %v662 = vpack.c.b16 %v638, %v636
        %v663 = vpack.c.b16 %v641, %v639
        %v664 = vpack.c.b16 %v642, %v640
        %v665 = vpack.c.b16 %v645, %v643
        %v666 = vpack.c.b16 %v646, %v644
        %v667 = vpack.c.b16 %v649, %v647
        %v668 = vpack.c.b16 %v650, %v648
        %v669 = vpack.c.b16 %v653, %v651
        %v670 = vpack.c.b16 %v654, %v652
        %v671 = vpack.c.b16 %v657, %v655
        %v672 = vpack.c.b16 %v658, %v656
        %vm685 = vcmask 883712
        %v687 = vsel %vm685, %v602, 0
        %vm689 = vcmask 1045504
        %v691 = vsel %vm689, %v671, 0
        %v694 = vsel %vm689, %v672, 0
        %696 = vmatprep.subr.bf16.mxu0 0
        %697 = vmatpush1.bf16.msra.mxu0 0
        %698 = vmatprep.subr.bf16.mxu0 %v694
        %699 = vmatpush1.bf16.msra.mxu0 %v691
        %700 = vmatprep.subr.bf16.mxu0 %v670
        %701 = vmatpush1.bf16.msra.mxu0 %v669
        %702 = vmatprep.subr.bf16.mxu0 %v668
        %703 = vmatpush1.bf16.msra.mxu0 %v667
        %704 = vmatprep.subr.bf16.mxu0 %v666
        %705 = vmatpush1.bf16.msra.mxu0 %v665
        %706 = vmatprep.subr.bf16.mxu0 %v664
        %707 = vmatpush1.bf16.msra.mxu0 %v663
        %708 = vmatprep.subr.bf16.mxu0 %v662
        %709 = vmatpush1.bf16.msra.mxu0 %v661
        %710 = vmatprep.subr.bf16.mxu0 %v660
        %711 = vmatpush1.bf16.msra.mxu0 %v659
        %712 = vmatprep.subr.bf16.mxu0 0
        %713 = vmatpush2.bf16.msra.mxu0 0
        %714 = vmatprep.subr.bf16.mxu0 0
        %715 = vmatpush2.bf16.msra.mxu0 0
        %716 = vmatprep.subr.bf16.mxu0 0
        %717 = vmatpush2.bf16.msra.mxu0 0
        %718 = vmatprep.subr.bf16.mxu0 0
        %719 = vmatpush2.bf16.msra.mxu0 0
        %720 = vmatprep.subr.bf16.mxu0 0
        %721 = vmatpush2.bf16.msra.mxu0 0
        %722 = vmatprep.subr.bf16.mxu0 0
        %723 = vmatpush2.bf16.msra.mxu0 0
        %724 = vmatprep.subr.bf16.mxu0 0
        %725 = vmatpush2.bf16.msra.mxu0 0
        %726 = vmatprep.subr.bf16.mxu0 0
        %727 = vmatpush2.bf16.msra.mxu0 0
        %728 = vmatprep.mubr.bf16.mxu0 0
        %729 = vmatmul.mubr.bf16.gmra.mxu0 %v687
        %v730 = vpop.f32.mrf.mxu0
        %v731 = vadd.f32 0.0, %v730
        %v732 = vpop.f32.mrf.mxu0
        %v733 = vadd.f32 0.0, %v732
        %v734 = vpop.f32.mrf.mxu0
        %v735 = vpop.f32.mrf.mxu0
        %736 = vdwg.mxu0
        %v737 = vld [vmem:[%s249] sm:$0x3]
        %v739 = vlaneseq
        %v740 = vshrl.u32 %v739, 7
        %v741 = vsub.s32 0, %v740
        %v742 = vrot.slane %v737, %v741
        %v743 = vlaneseq
        %v744 = vshrl.u32 %v743, 7
        %v745 = vsub.s32 1, %v744
        %v746 = vrot.slane %v737, %v745
        %v749 = vmul.f32 %v731, %v742
        %v750 = vmul.f32 %v733, %v746
        %v751 = vld [vmem:[#allocation3] sm:$0xff]
        %v752 = vadd.f32 %v749, %v750
        %753 = vadd.xlane.f32.xlu0 %v752
        %v754 = vpop.xlane.xlu0 %753
        %v755 = vadd.f32 %v751, %v754
        %vm756 = vcmask 7168
        %757 = vst.msk [vmem:[#allocation3] sm:$0xff] %vm756, %v755
        %v758 = vld [vmem:[#allocation4] sm:$0xff]
        %v759 = vmul.f32 %v731, %v749
        %v760 = vmul.f32 %v733, %v750
        %v761 = vadd.f32 %v759, %v760
        %762 = vadd.xlane.f32.xlu0 %v761
        %v763 = vpop.xlane.xlu0 %762
        %v764 = vadd.f32 %v758, %v763
        %765 = vst.msk [vmem:[#allocation4] sm:$0xff] %vm756, %v764
        %s766 = smul.u32 %s28, 2
        %s767 = smul.addr %s766, 8
        %s768 = scalar_lea.vmem %s278, %s767 [#allocation12]
        %769 = vst [vmem:[%s768] sm:$0xff] %v731
        %770 = vst [vmem:[%s768 + $0x8] sm:$0xff] %v733
        %p771 = scmp.eq.s32.totalorder %s28, 3
        // Predicated region
        $region53: #{tpu_custom_call.1} parent=35 // pred_check
          %p772 = pneg %p771
        $region54: #{tpu_custom_call.1} parent=35 // pred_check_branch
          %774 = sbr.rel (%p772) target = $region56
        $region55: #{tpu_custom_call.1} parent=35 // pred_region
          %v775 = vld [vmem:[#allocation3] sm:$0xff]
          %v776 = vmul.f32 %v775, 0.001953125
          %v777 = vld [vmem:[#allocation4] sm:$0xff]
          %v778 = vmul.f32 %v777, 0.001953125
          %v779 = vmul.f32 %v776, %v776
          %v780 = vsub.f32 %v778, %v779
          %v781 = vadd.f32 %v780, 1e-05
          %v782 = vrsqrt.pop %v781
          %v783 = vld [vmem:[%s278] sm:$0xff]
          %v784 = vld [vmem:[%s278 + $0x8] sm:$0xff]
          %v785 = vld [vmem:[%s278 + $0x10] sm:$0xff]
          %v786 = vld [vmem:[%s278 + $0x18] sm:$0xff]
          %v787 = vld [vmem:[%s278 + $0x20] sm:$0xff]
          %v788 = vld [vmem:[%s278 + $0x28] sm:$0xff]
          %v789 = vld [vmem:[%s278 + $0x30] sm:$0xff]
          %v790 = vld [vmem:[%s278 + $0x38] sm:$0xff]
          %792 = vset.pattern.permute.xlu0 0
          %793 = vperm.xlu0 %792, %v776
          %v794 = vpop.permute.xlu0 %793
          %v796 = vsub.f32 %v783, %v794
          %v797 = vsub.f32 %v784, %v794
          %v798 = vsub.f32 %v785, %v794
          %v799 = vsub.f32 %v786, %v794
          %v800 = vsub.f32 %v787, %v794
          %v801 = vsub.f32 %v788, %v794
          %v802 = vsub.f32 %v789, %v794
          %v803 = vsub.f32 %v790, %v794
          %805 = vset.pattern.permute.xlu0 0
          %806 = vperm.xlu0 %805, %v782
          %v807 = vpop.permute.xlu0 %806
          %v809 = vmul.f32 %v796, %v807
          %v810 = vmul.f32 %v797, %v807
          %v811 = vmul.f32 %v798, %v807
          %v812 = vmul.f32 %v799, %v807
          %v813 = vmul.f32 %v800, %v807
          %v814 = vmul.f32 %v801, %v807
          %v815 = vmul.f32 %v802, %v807
          %v816 = vmul.f32 %v803, %v807
          %s817 = sld [smem:[#allocation5]]
          %vm818 = vcmp.ge.f32.partialorder %v809, 0.0
          %vm819 = vcmp.ge.f32.partialorder %v810, 0.0
          %vm820 = vcmp.ge.f32.partialorder %v811, 0.0
          %vm821 = vcmp.ge.f32.partialorder %v812, 0.0
          %vm822 = vcmp.ge.f32.partialorder %v813, 0.0
          %vm823 = vcmp.ge.f32.partialorder %v814, 0.0
          %vm824 = vcmp.ge.f32.partialorder %v815, 0.0
          %vm825 = vcmp.ge.f32.partialorder %v816, 0.0
          %v826 = vstv %s817
          %v827 = vmul.f32 %v826, %v809
          %v828 = vmul.f32 %v826, %v810
          %v829 = vmul.f32 %v826, %v811
          %v830 = vmul.f32 %v826, %v812
          %v831 = vmul.f32 %v826, %v813
          %v832 = vmul.f32 %v826, %v814
          %v833 = vmul.f32 %v826, %v815
          %v834 = vmul.f32 %v826, %v816
          %v835 = vsel %vm818, %v809, %v827
          %v836 = vsel %vm819, %v810, %v828
          %v837 = vsel %vm820, %v811, %v829
          %v838 = vsel %vm821, %v812, %v830
          %v839 = vsel %vm822, %v813, %v831
          %v840 = vsel %vm823, %v814, %v832
          %v841 = vsel %vm824, %v815, %v833
          %v842 = vsel %vm825, %v816, %v834
          %843 = vst [vmem:[%s278] sm:$0xff] %v835
          %844 = vst [vmem:[%s278 + $0x8] sm:$0xff] %v836
          %845 = vst [vmem:[%s278 + $0x10] sm:$0xff] %v837
          %846 = vst [vmem:[%s278 + $0x18] sm:$0xff] %v838
          %847 = vst [vmem:[%s278 + $0x20] sm:$0xff] %v839
          %848 = vst [vmem:[%s278 + $0x28] sm:$0xff] %v840
          %849 = vst [vmem:[%s278 + $0x30] sm:$0xff] %v841
          %850 = vst [vmem:[%s278 + $0x38] sm:$0xff] %v842
        $region56: #{tpu_custom_call.1} parent=35 // pred_fallthru
          _
        %s851 = sand.u32 %s139, 1
        %s852 = scalar_lea.sflag [#allocation8], %s851
        %s853 = sand.u32 %s139, 1
        %s854 = smul.addr %s853, 64
        %s855 = scalar_lea.vmem [#allocation12], %s854
        // Predicated region
        $region57: #{tpu_custom_call.1} parent=35 // pred_check
          %p856 = pneg %p149
        $region58: #{tpu_custom_call.1} parent=35 // pred_check_branch
          %858 = sbr.rel (%p856) target = $region60
        $region59: #{tpu_custom_call.1} parent=35 // pred_region
          %s860 = ssub.s32 1024, 1024
          %861 = vsyncadd %s852, %s860
          %s862 = smul.addr %s27, 8
          %s863 = smul.addr %s862, 128
          %s864 = scalar_lea.hbm %s4, %s863
          %s865 = sshll.u32 %s855, 4
          %s866 = int_to_ptr.vmem [resolvable:$true] %s865
          %871 = dma.vmem_to_hbm [thread:$0]  %s866, 1024, %s864, %s852, 256, 256, 16
        $region60: #{tpu_custom_call.1} parent=35 // pred_fallthru
          _
      $region36: #{tpu_custom_call.1} parent=5 // pred_fallthru
        _
      %p872 = scmp.le.s32.totalorder 2, %s18
      // Predicated region
      $region61: #{tpu_custom_call.1} parent=5 // pred_check
        %p873 = pneg %p872
      $region62: #{tpu_custom_call.1} parent=5 // pred_check_branch
        %875 = sbr.rel (%p873) target = $region64
      $region63: #{tpu_custom_call.1} parent=5 // pred_region
        %s876 = ssub.s32 %s18, 2
        // Predicated region
        $region65: #{tpu_custom_call.1} parent=63 // pred_check
          %p877 = pneg %p155
        $region66: #{tpu_custom_call.1} parent=63 // pred_check_branch
          %879 = sbr.rel (%p877) target = $region68
        $region67: #{tpu_custom_call.1} parent=63 // pred_region
          %s880 = sand.u32 %s140, 1
          %s881 = scalar_lea.sflag [#allocation8], %s880
          %s882 = sand.u32 %s140, 1
          %s883 = smul.addr %s882, 64
          %s884 = scalar_lea.vmem [#allocation12], %s883
          %885 = dma.done %s881, 1024
        $region68: #{tpu_custom_call.1} parent=63 // pred_fallthru
          _
      $region64: #{tpu_custom_call.1} parent=5 // pred_fallthru
        _
    $region6: #{tpu_custom_call.1} parent=1 // loop_footer
      %s22 = sadd.s32 1, %s18
    $region7: #{tpu_custom_call.1} parent=1 // loop_footer_branch
      %17 = sbr.rel target = $region3
    $region8: #{tpu_custom_call.1} parent=1 // loop_exit
      _
    %886 = vsyncpa [#allocation7], 1
    %s887 = scalar_lea.sflag [#allocation7], 1
    %888 = vsyncpa %s887, 1
    %889 = vsyncpa [#allocation10], 1
    %890 = vsyncpa [#allocation8], 1
    %s891 = scalar_lea.sflag [#allocation8], 1
    %892 = vsyncpa %s891, 1

</llo_original>
